<compile_context>
chip_gen: v6e
topology: v6e:2x2x1
jax: 0.10.0
libtpu: 0.0.40
codegen_flags: <defaults>
</compile_context>

<pallas_src>
import functools

import jax
import jax.numpy as jnp
from jax.experimental import pallas as pl
from jax.experimental.pallas import tpu as pltpu


def _round_up(x, m):
    return ((x + m - 1) // m) * m


def _cdiv(a, b):
    return (a + b - 1) // b


def _mine_kernel(xy_ref, w1_ref, b1_ref, w2_ref, b2_ref, w3t_ref, b3_ref,
                 o_ref, *, precision):
    # Layer 1: Linear(2*input_dim -> Hp) + ReLU, single fused matmul over the
    # pre-concatenated [tm, 2*in_dim] tile.  f32 accumulation.
    h1 = jnp.dot(xy_ref[...], w1_ref[...], precision=precision,
                 preferred_element_type=jnp.float32)
    h1 = jnp.maximum(h1 + b1_ref[...], 0.0)
    # Layer 2: Linear(Hp -> Hp) + ReLU (operands in MXU dtype, f32 accumulate).
    h2 = jnp.dot(h1.astype(w2_ref.dtype), w2_ref[...], precision=precision,
                 preferred_element_type=jnp.float32)
    h2 = jnp.maximum(h2 + b2_ref[...], 0.0)
    # Layer 3: Linear(Hp -> 1) as VPU multiply + XLU lane reduction in f32
    # (an N=1 matmul would waste >99% of the systolic array).
    out = jnp.sum(h2 * w3t_ref[...], axis=-1, keepdims=True) + b3_ref[...]
    o_ref[...] = out.astype(o_ref.dtype)


def mine_forward(x, y, params, *, block_rows=2048, mxu_dtype=jnp.bfloat16):
    """x, y: [B, input_dim] float32.  Returns [B, 1] float32 (same as PyTorch).

    mxu_dtype: dtype of MXU operands (weights + streamed activations).  bf16
    (default) keeps f32 accumulation but cuts MXU passes ~3x and input DMA 2x;
    pass jnp.float32 for an exact Precision.HIGHEST match of the reference.
    """
    w1, b1, w2, b2, w3, b3 = params          # w: [in, out], b: [1, out]
    B, in_dim = x.shape
    in2 = 2 * in_dim
    H = w1.shape[1]

    f32_mxu = jnp.dtype(mxu_dtype) == jnp.dtype(jnp.float32)
    precision = (jax.lax.Precision.HIGHEST if f32_mxu
                 else jax.lax.Precision.DEFAULT)

    # ---- one-time weight prep (tiny arrays; fused/cached under jit) ---------
    Hp = max(128, _round_up(H, 128))         # lane/MXU-friendly hidden dim
    if Hp != H:
        pad_c = ((0, 0), (0, Hp - H))
        w1 = jnp.pad(w1, pad_c)
        b1 = jnp.pad(b1, pad_c)
        b2 = jnp.pad(b2, pad_c)
        w2 = jnp.pad(w2, ((0, Hp - H), (0, Hp - H)))
        w3 = jnp.pad(w3, ((0, Hp - H), (0, 0)))
    w3t = w3.T                               # [1, Hp], stays f32
    w1 = w1.astype(mxu_dtype)                # MXU operands; biases stay f32
    w2 = w2.astype(mxu_dtype)

    # Fold the concat into the wrapper: one layer-1 matmul, one input stream.
    xy = jnp.concatenate((x, y), axis=1).astype(mxu_dtype)

    # ---- batch tiling --------------------------------------------------------
    sub = 8 if f32_mxu else 16               # sublane multiple for tile dtype
    n_tiles = _cdiv(B, block_rows)
    if n_tiles < 2 and B >= 2 * sub:
        n_tiles = 2                          # >=2 grid steps: pipeline overlap,
                                             # v7x second TensorCore can engage
    tm = _round_up(_cdiv(B, n_tiles), sub)   # balanced tiles -> minimal padding

    # VMEM cap so the kernel stays well under v7x's 64 MiB physical VMEM:
    # ~3 f32 [tm, Hp] intermediates + double-buffered in/out tiles per row,
    # plus (double-buffered) resident weights.
    in_bytes = jnp.dtype(mxu_dtype).itemsize
    weight_bytes = (in2 * Hp + Hp * Hp) * in_bytes + (3 * Hp + 1) * 4
    bytes_per_row = 3 * Hp * 4 + 2 * (in2 * in_bytes + 4)
    vmem_budget = 24 * 1024 * 1024
    tm_cap = max(sub, ((vmem_budget - 2 * weight_bytes) // bytes_per_row)
                 // sub * sub)
    tm = min(tm, tm_cap)

    b_pad = _round_up(B, tm)
    if b_pad != B:
        xy = jnp.pad(xy, ((0, b_pad - B), (0, 0)))
    grid = (b_pad // tm,)

    flops = 2 * b_pad * (in2 * Hp + Hp * Hp + Hp)
    bytes_accessed = (b_pad * (in2 * in_bytes + 4)
                      + (in2 * Hp + Hp * Hp) * in_bytes + (3 * Hp + 1) * 4)

    def _resident(shape):
        # Full-array block + constant index_map -> stays in VMEM across steps.
        return pl.BlockSpec(shape, lambda i: (0, 0))

    out = pl.pallas_call(
        functools.partial(_mine_kernel, precision=precision),
        out_shape=jax.ShapeDtypeStruct((b_pad, 1), jnp.float32),
        grid=grid,
        in_specs=[
            pl.BlockSpec((tm, in2), lambda i: (i, 0)),  # [x | y] tile (pipelined)
            _resident((in2, Hp)),                       # w1
            _resident((1, Hp)),                         # b1 (f32)
            _resident((Hp, Hp)),                        # w2
            _resident((1, Hp)),                         # b2 (f32)
            _resident((1, Hp)),                         # w3^T (f32)
            _resident((1, 1)),                          # b3 (f32)
        ],
        out_specs=pl.BlockSpec((tm, 1), lambda i: (i, 0)),
        compiler_params=pltpu.CompilerParams(
            dimension_semantics=("parallel",),
            vmem_limit_bytes=32 * 1024 * 1024),
        cost_estimate=pl.CostEstimate(
            flops=flops, transcendentals=0, bytes_accessed=bytes_accessed),
    )(xy, w1, b1, w2, b2, w3t, b3)
    return out[:B]


def init_mine_params(key, input_dim, hidden_dim=128):
    """nn.Linear-style init: U(-1/sqrt(fan_in), 1/sqrt(fan_in)).
    Weights stored transposed relative to PyTorch: shape [in, out]."""
    in_dim = input_dim * 2
    dims = [(in_dim, hidden_dim), (hidden_dim, hidden_dim), (hidden_dim, 1)]
    params = []
    keys = jax.random.split(key, 2 * len(dims))
    for i, (fan_in, fan_out) in enumerate(dims):
        bound = 1.0 / jnp.sqrt(float(fan_in))
        w = jax.random.uniform(keys[2 * i], (fan_in, fan_out),
                               minval=-bound, maxval=bound, dtype=jnp.float32)
        b = jax.random.uniform(keys[2 * i + 1], (1, fan_out),
                               minval=-bound, maxval=bound, dtype=jnp.float32)
        params += [w, b]
    return tuple(params)


def _ref_forward(x, y, params, mxu_dtype):
    """Plain-JAX reference of the same math (same operand dtype / precision)."""
    w1, b1, w2, b2, w3, b3 = params
    f32_mxu = jnp.dtype(mxu_dtype) == jnp.dtype(jnp.float32)
    prec = (jax.lax.Precision.HIGHEST if f32_mxu
            else jax.lax.Precision.DEFAULT)
    c = jnp.concatenate((x, y), axis=1).astype(mxu_dtype)
    h = jnp.dot(c, w1.astype(mxu_dtype), precision=prec,
                preferred_element_type=jnp.float32)
    h = jnp.maximum(h + b1, 0.0)
    h = jnp.dot(h.astype(mxu_dtype), w2.astype(mxu_dtype), precision=prec,
                preferred_element_type=jnp.float32)
    h = jnp.maximum(h + b2, 0.0)
    return jnp.dot(h, w3, precision=jax.lax.Precision.HIGHEST,
                   preferred_element_type=jnp.float32) + b3


if __name__ == "__main__":
    root = jax.random.PRNGKey(0)

    def run_case(batch, input_dim, hidden_dim, block_rows, mxu_dtype, atol, rtol):
        case_key = jax.random.fold_in(root, batch * 131 + hidden_dim)
        k_x, k_y, k_p = jax.random.split(case_key, 3)
        x = jax.random.normal(k_x, (batch, input_dim), dtype=jnp.float32)
        y = jax.random.normal(k_y, (batch, input_dim), dtype=jnp.float32)
        params = init_mine_params(k_p, input_dim, hidden_dim)
        out = mine_forward(x, y, params, block_rows=block_rows,
                           mxu_dtype=mxu_dtype)
        jax.block_until_ready(out)
        ref = _ref_forward(x, y, params, mxu_dtype)
        assert out.shape == (batch, 1), out.shape
        max_err = float(jnp.max(jnp.abs(out - ref)))
        assert jnp.allclose(out, ref, atol=atol, rtol=rtol), max_err

    # Small case from the spec (bf16 MXU operands, f32 accumulation), grid=1.
    run_case(batch=8, input_dim=16, hidden_dim=32, block_rows=2048,
             mxu_dtype=jnp.bfloat16, atol=2e-3, rtol=2e-3)
    # grid > 1, batch not a multiple of the tile, default hidden_dim=128.
    run_case(batch=100, input_dim=16, hidden_dim=128, block_rows=32,
             mxu_dtype=jnp.bfloat16, atol=2e-3, rtol=2e-3)
    # Exact-f32 path (Precision.HIGHEST) with hidden padding and grid > 1.
    run_case(batch=24, input_dim=8, hidden_dim=64, block_rows=16,
             mxu_dtype=jnp.float32, atol=1e-5, rtol=1e-5)

    print("KERNEL_OK")
</pallas_src>

<mosaic_0001>
module attributes {stable_mosaic.version = 11 : i64} {
  func.func @_mine_kernel(%arg0: i32, %arg1: memref<16x32xbf16, #tpu.memory_space<vmem>>, %arg2: memref<32x128xbf16, #tpu.memory_space<vmem>>, %arg3: memref<1x128xf32, #tpu.memory_space<vmem>>, %arg4: memref<128x128xbf16, #tpu.memory_space<vmem>>, %arg5: memref<1x128xf32, #tpu.memory_space<vmem>>, %arg6: memref<1x128xf32, #tpu.memory_space<vmem>>, %arg7: memref<1x1xf32, #tpu.memory_space<vmem>>, %arg8: memref<16x1xf32, #tpu.memory_space<vmem>>) attributes {dimension_semantics = [#tpu.dimension_semantics<parallel>], iteration_bounds = array<i64: 1>, scalar_prefetch = 0 : i64, scratch_operands = 0 : i64, tpu.core_type = #tpu.core_type<tc>, window_params = [{transform_indices = @transform_0, window_bounds = array<i64: 16, 32>}, {pipeline_mode = #tpu.pipeline_mode<synchronous>, transform_indices = @transform_1, window_bounds = array<i64: 32, 128>}, {pipeline_mode = #tpu.pipeline_mode<synchronous>, transform_indices = @transform_2, window_bounds = array<i64: 1, 128>}, {pipeline_mode = #tpu.pipeline_mode<synchronous>, transform_indices = @transform_3, window_bounds = array<i64: 128, 128>}, {pipeline_mode = #tpu.pipeline_mode<synchronous>, transform_indices = @transform_4, window_bounds = array<i64: 1, 128>}, {pipeline_mode = #tpu.pipeline_mode<synchronous>, transform_indices = @transform_5, window_bounds = array<i64: 1, 128>}, {pipeline_mode = #tpu.pipeline_mode<synchronous>, transform_indices = @transform_6, window_bounds = array<i64: 1, 1>}, {transform_indices = @transform_7, window_bounds = array<i64: 16, 1>}]} {
    %c0 = arith.constant 0 : index
    %c0_0 = arith.constant 0 : index
    %0 = vector.load %arg1[%c0, %c0_0] : memref<16x32xbf16, #tpu.memory_space<vmem>>, vector<16x32xbf16>
    %c0_1 = arith.constant 0 : index
    %c0_2 = arith.constant 0 : index
    %1 = vector.load %arg2[%c0_1, %c0_2] : memref<32x128xbf16, #tpu.memory_space<vmem>>, vector<32x128xbf16>
    %cst = arith.constant dense<0.000000e+00> : vector<16x128xf32>
    %2 = tpu.matmul %0, %1, %cst {dimension_numbers = #tpu.dot_dimension_numbers<[1], [0], [0], [1], [0, 0, 1, 1], [], []>} : vector<16x32xbf16>, vector<32x128xbf16>, vector<16x128xf32> -> vector<16x128xf32>
    %c0_3 = arith.constant 0 : index
    %c0_4 = arith.constant 0 : index
    %3 = vector.load %arg3[%c0_3, %c0_4] : memref<1x128xf32, #tpu.memory_space<vmem>>, vector<1x128xf32>
    %4 = vector.broadcast %3 : vector<1x128xf32> to vector<16x128xf32>
    %5 = arith.addf %2, %4 : vector<16x128xf32>
    %cst_5 = arith.constant 0.000000e+00 : f32
    %6 = vector.broadcast %cst_5 : f32 to vector<16x128xf32>
    %7 = arith.maximumf %5, %6 : vector<16x128xf32>
    %8 = arith.truncf %7 : vector<16x128xf32> to vector<16x128xbf16>
    %c0_6 = arith.constant 0 : index
    %c0_7 = arith.constant 0 : index
    %9 = vector.load %arg4[%c0_6, %c0_7] : memref<128x128xbf16, #tpu.memory_space<vmem>>, vector<128x128xbf16>
    %cst_8 = arith.constant dense<0.000000e+00> : vector<16x128xf32>
    %10 = tpu.matmul %8, %9, %cst_8 {dimension_numbers = #tpu.dot_dimension_numbers<[1], [0], [0], [1], [0, 0, 1, 1], [], []>} : vector<16x128xbf16>, vector<128x128xbf16>, vector<16x128xf32> -> vector<16x128xf32>
    %c0_9 = arith.constant 0 : index
    %c0_10 = arith.constant 0 : index
    %11 = vector.load %arg5[%c0_9, %c0_10] : memref<1x128xf32, #tpu.memory_space<vmem>>, vector<1x128xf32>
    %12 = vector.broadcast %11 : vector<1x128xf32> to vector<16x128xf32>
    %13 = arith.addf %10, %12 : vector<16x128xf32>
    %cst_11 = arith.constant 0.000000e+00 : f32
    %14 = vector.broadcast %cst_11 : f32 to vector<16x128xf32>
    %15 = arith.maximumf %13, %14 : vector<16x128xf32>
    %c0_12 = arith.constant 0 : index
    %c0_13 = arith.constant 0 : index
    %16 = vector.load %arg6[%c0_12, %c0_13] : memref<1x128xf32, #tpu.memory_space<vmem>>, vector<1x128xf32>
    %17 = vector.broadcast %16 : vector<1x128xf32> to vector<16x128xf32>
    %18 = arith.mulf %15, %17 : vector<16x128xf32>
    %cst_14 = arith.constant dense<0.000000e+00> : vector<16xf32>
    %19 = vector.multi_reduction <add>, %18, %cst_14 [1] : vector<16x128xf32> to vector<16xf32>
    %20 = vector.shape_cast %19 : vector<16xf32> to vector<16x1xf32>
    %c0_15 = arith.constant 0 : index
    %c0_16 = arith.constant 0 : index
    %21 = vector.load %arg7[%c0_15, %c0_16] : memref<1x1xf32, #tpu.memory_space<vmem>>, vector<1x1xf32>
    %22 = vector.broadcast %21 : vector<1x1xf32> to vector<16x1xf32>
    %23 = arith.addf %20, %22 : vector<16x1xf32>
    %c0_17 = arith.constant 0 : index
    %c0_18 = arith.constant 0 : index
    %24 = vector.load %arg8[%c0_17, %c0_18] : memref<16x1xf32, #tpu.memory_space<vmem>>, vector<16x1xf32>
    tpu.vector_store %arg8[%c0_17, %c0_18], %23 {strides = array<i32>} : memref<16x1xf32, #tpu.memory_space<vmem>>, vector<16x1xf32>,
    return
  }
  func.func @transform_0(%arg0: i32) -> (i32, i32) {
    %c0_i32 = arith.constant 0 : i32
    %c0_i32_0 = arith.constant 0 : i32
    return %arg0, %c0_i32 : i32, i32
  }
  func.func @transform_1(%arg0: i32) -> (i32, i32) {
    %c0_i32 = arith.constant 0 : i32
    %c0_i32_0 = arith.constant 0 : i32
    %c0_i32_1 = arith.constant 0 : i32
    return %c0_i32, %c0_i32_0 : i32, i32
  }
  func.func @transform_2(%arg0: i32) -> (i32, i32) {
    %c0_i32 = arith.constant 0 : i32
    %c0_i32_0 = arith.constant 0 : i32
    %c0_i32_1 = arith.constant 0 : i32
    return %c0_i32, %c0_i32_0 : i32, i32
  }
  func.func @transform_3(%arg0: i32) -> (i32, i32) {
    %c0_i32 = arith.constant 0 : i32
    %c0_i32_0 = arith.constant 0 : i32
    %c0_i32_1 = arith.constant 0 : i32
    return %c0_i32, %c0_i32_0 : i32, i32
  }
  func.func @transform_4(%arg0: i32) -> (i32, i32) {
    %c0_i32 = arith.constant 0 : i32
    %c0_i32_0 = arith.constant 0 : i32
    %c0_i32_1 = arith.constant 0 : i32
    return %c0_i32, %c0_i32_0 : i32, i32
  }
  func.func @transform_5(%arg0: i32) -> (i32, i32) {
    %c0_i32 = arith.constant 0 : i32
    %c0_i32_0 = arith.constant 0 : i32
    %c0_i32_1 = arith.constant 0 : i32
    return %c0_i32, %c0_i32_0 : i32, i32
  }
  func.func @transform_6(%arg0: i32) -> (i32, i32) {
    %c0_i32 = arith.constant 0 : i32
    %c0_i32_0 = arith.constant 0 : i32
    %c0_i32_1 = arith.constant 0 : i32
    return %c0_i32, %c0_i32_0 : i32, i32
  }
  func.func @transform_7(%arg0: i32) -> (i32, i32) {
    %c0_i32 = arith.constant 0 : i32
    %c0_i32_0 = arith.constant 0 : i32
    return %arg0, %c0_i32 : i32, i32
  }
}

</mosaic_0001>

<llo_original>
// kernel: tpu_custom_call.1
$region0: #{tpu_custom_call.1}
  #allocation0 [shape = 'u32[]', space=smem, size = 0x4, offset = 0x4, fixed_abs, tag = 'smem constant byte address 0x4 - core index']
  #allocation1 [shape = 'u32[144,128]{1,0:T(1,128)}', space=vmem, size = 0x12000, scoped, tag = 'internal scratch']
  #allocation2 [shape = 'f32[1,1]{1,0:T(1,128)S(1)}', space=vmem, size = 0x200, scoped, tag = 'scoped memory for tpu_custom_call.1']
  %s0 = inlined_call_operand.hbm [shape: bf16[16,32], index: 0, kind: input, shape index: {}]
  %s1 = inlined_call_operand.hbm [shape: bf16[32,128], index: 1, kind: input, shape index: {}]
  %s2 = inlined_call_operand.vmem [shape: f32[1,128], index: 2, kind: input, shape index: {}]
  %s3 = inlined_call_operand.hbm [shape: bf16[128,128], index: 3, kind: input, shape index: {}]
  %s4 = inlined_call_operand.vmem [shape: f32[1,128], index: 4, kind: input, shape index: {}]
  %s5 = inlined_call_operand.vmem [shape: f32[1,128], index: 5, kind: input, shape index: {}]
  %s6 = inlined_call_operand.<no memory space> [shape: f32[1,1], index: 6, kind: input, shape index: {}]
  %s7 = inlined_call_operand.vmem [shape: f32[16,1], index: 7, kind: output, shape index: {}]
  %s8 = sld [smem:[#allocation0]]
  $region50: #{tpu_custom_call.1} parent=0
    _
  %s10 = ssub.s32 1, %s8
  %s11 = scalar_select 0, %s10, %s8
  %v12 = vstv %s6
  %13 = vst [vmem:[#allocation2] sm:$0x1] %v12
  $region1: #{tpu_custom_call.1} parent=0
    #allocation3 [shape = 'u8[4096]{0}', space=vmem, size = 0x1000, scoped, tag = 'input window, operand 0, single buffered']
    #allocation4 [shape = 's32[1]{0}', space=sflag, size = 0x4, scoped, tag = 'scoped memory for tpu_custom_call.1']
    #allocation5 [shape = 'u8[8192]{0}', space=vmem, size = 0x2000, scoped, tag = 'input window, operand 1, single buffered']
    #allocation6 [shape = 's32[1]{0}', space=sflag, size = 0x4, scoped, tag = 'scoped memory for tpu_custom_call.1']
    #allocation7 [shape = 'u8[32768]{0}', space=vmem, size = 0x8000, scoped, tag = 'input window, operand 3, single buffered']
    %14 = vsyncpa [#allocation4], 0
    %15 = vsyncpa [#allocation6], 0
    // Predicated region
    $region2: #{tpu_custom_call.1} parent=1 // pred_check
      _
    $region3: #{tpu_custom_call.1} parent=1 // pred_check_branch
      %17 = sbr.rel (0) target = $region5
    $region4: #{tpu_custom_call.1} parent=1 // pred_region
      %s19 = ssub.s32 128, 128
      %20 = vsyncadd [#allocation4], %s19
      %s21 = sshll.u32 [#allocation3], 4
      %s22 = int_to_ptr.vmem [resolvable:$true] %s21
      %27 = dma.hbm_to_vmem [thread:$0]  %s0, 128, %s22, [#allocation4], 64, 64, 4
    $region5: #{tpu_custom_call.1} parent=1 // pred_fallthru
      _
    // Predicated region
    $region6: #{tpu_custom_call.1} parent=1 // pred_check
      _
    $region7: #{tpu_custom_call.1} parent=1 // pred_check_branch
      %29 = sbr.rel (0) target = $region9
    $region8: #{tpu_custom_call.1} parent=1 // pred_region
      %s31 = ssub.s32 256, 256
      %32 = vsyncadd [#allocation6], %s31
      %s33 = sshll.u32 [#allocation5], 4
      %s34 = int_to_ptr.vmem [resolvable:$true] %s33
      %39 = dma.hbm_to_vmem [thread:$0]  %s1, 256, %s34, [#allocation6], 64, 64, 4
    $region9: #{tpu_custom_call.1} parent=1 // pred_fallthru
      _
    // Predicated region
    $region10: #{tpu_custom_call.1} parent=1 // pred_check
      _
    $region11: #{tpu_custom_call.1} parent=1 // pred_check_branch
      %41 = sbr.rel (0) target = $region13
    $region12: #{tpu_custom_call.1} parent=1 // pred_region
      _
    $region13: #{tpu_custom_call.1} parent=1 // pred_fallthru
      _
    // Predicated region
    $region14: #{tpu_custom_call.1} parent=1 // pred_check
      _
    $region15: #{tpu_custom_call.1} parent=1 // pred_check_branch
      %43 = sbr.rel (0) target = $region17
    $region16: #{tpu_custom_call.1} parent=1 // pred_region
      %s45 = ssub.s32 1024, 1024
      %46 = vsyncadd [#allocation6], %s45
      %s47 = sshll.u32 [#allocation7], 4
      %s48 = int_to_ptr.vmem [resolvable:$true] %s47
      %53 = dma.hbm_to_vmem [thread:$0]  %s3, 1024, %s48, [#allocation6], 64, 64, 4
    $region17: #{tpu_custom_call.1} parent=1 // pred_fallthru
      _
    // Predicated region
    $region18: #{tpu_custom_call.1} parent=1 // pred_check
      _
    $region19: #{tpu_custom_call.1} parent=1 // pred_check_branch
      %55 = sbr.rel (0) target = $region21
    $region20: #{tpu_custom_call.1} parent=1 // pred_region
      _
    $region21: #{tpu_custom_call.1} parent=1 // pred_fallthru
      _
    // Predicated region
    $region22: #{tpu_custom_call.1} parent=1 // pred_check
      _
    $region23: #{tpu_custom_call.1} parent=1 // pred_check_branch
      %57 = sbr.rel (0) target = $region25
    $region24: #{tpu_custom_call.1} parent=1 // pred_region
      _
    $region25: #{tpu_custom_call.1} parent=1 // pred_fallthru
      _
    // Predicated region
    $region26: #{tpu_custom_call.1} parent=1 // pred_check
      _
    $region27: #{tpu_custom_call.1} parent=1 // pred_check_branch
      %59 = sbr.rel (0) target = $region29
    $region28: #{tpu_custom_call.1} parent=1 // pred_region
      _
    $region29: #{tpu_custom_call.1} parent=1 // pred_fallthru
      _
    // Predicated region
    $region30: #{tpu_custom_call.1} parent=1 // pred_check
      _
    $region31: #{tpu_custom_call.1} parent=1 // pred_check_branch
      %61 = sbr.rel (0) target = $region33
    $region32: #{tpu_custom_call.1} parent=1 // pred_region
      %62 = dma.done [#allocation4], 128
    $region33: #{tpu_custom_call.1} parent=1 // pred_fallthru
      _
    // Predicated region
    $region34: #{tpu_custom_call.1} parent=1 // pred_check
      _
    $region35: #{tpu_custom_call.1} parent=1 // pred_check_branch
      %64 = sbr.rel (0) target = $region37
    $region36: #{tpu_custom_call.1} parent=1 // pred_region
      %65 = dma.done [#allocation6], 256
    $region37: #{tpu_custom_call.1} parent=1 // pred_fallthru
      _
    // Predicated region
    $region38: #{tpu_custom_call.1} parent=1 // pred_check
      _
    $region39: #{tpu_custom_call.1} parent=1 // pred_check_branch
      %67 = sbr.rel (0) target = $region41
    $region40: #{tpu_custom_call.1} parent=1 // pred_region
      %68 = dma.done [#allocation6], 1024
    $region41: #{tpu_custom_call.1} parent=1 // pred_fallthru
      _
    %v70 = vld [vmem:[#allocation3] sm:$0xf]
    %v71 = vld [vmem:[#allocation3 + $0x4] sm:$0xf]
    %v72 = vld [vmem:[#allocation5] sm:$0xf]
    %v73 = vld [vmem:[#allocation5 + $0x4] sm:$0xf]
    %v74 = vld [vmem:[#allocation5 + $0x8] sm:$0xf]
    %v75 = vld [vmem:[#allocation5 + $0xc] sm:$0xf]
    %v76 = vld [vmem:[%s2] sm:$0x1]
    %v78 = vlaneseq
    %v79 = vshrl.u32 %v78, 7
    %v80 = vsub.s32 0, %v79
    %v81 = vrot.slane %v76, %v80
    %v85 = vunpack.c.l.b16 %v70
    %v86 = vunpack.c.l.b16 %v71
    %v87 = vpack.c.b16 %v86, %v85
    %v92 = vunpack.c.l.b16 %v72
    %v93 = vunpack.c.l.b16 %v73
    %v94 = vunpack.c.l.b16 %v74
    %v95 = vunpack.c.l.b16 %v75
    %v96 = vpack.c.b16 %v93, %v92
    %v97 = vpack.c.b16 %v95, %v94
    %vm100 = vcmask 261120
    %v102 = vsel %vm100, %v87, 0
    %104 = vmatprep.subr.bf16.mxu0 0
    %105 = vmatpush1.bf16.msra.mxu0 0
    %106 = vmatprep.subr.bf16.mxu0 0
    %107 = vmatpush1.bf16.msra.mxu0 0
    %108 = vmatprep.subr.bf16.mxu0 0
    %109 = vmatpush1.bf16.msra.mxu0 0
    %110 = vmatprep.subr.bf16.mxu0 0
    %111 = vmatpush1.bf16.msra.mxu0 0
    %112 = vmatprep.subr.bf16.mxu0 0
    %113 = vmatpush1.bf16.msra.mxu0 0
    %114 = vmatprep.subr.bf16.mxu0 0
    %115 = vmatpush1.bf16.msra.mxu0 0
    %116 = vmatprep.subr.bf16.mxu0 0
    %117 = vmatpush1.bf16.msra.mxu0 %v97
    %118 = vmatprep.subr.bf16.mxu0 0
    %119 = vmatpush1.bf16.msra.mxu0 %v96
    %120 = vmatprep.subr.bf16.mxu0 0
    %121 = vmatpush2.bf16.msra.mxu0 0
    %122 = vmatprep.subr.bf16.mxu0 0
    %123 = vmatpush2.bf16.msra.mxu0 0
    %124 = vmatprep.subr.bf16.mxu0 0
    %125 = vmatpush2.bf16.msra.mxu0 0
    %126 = vmatprep.subr.bf16.mxu0 0
    %127 = vmatpush2.bf16.msra.mxu0 0
    %128 = vmatprep.subr.bf16.mxu0 0
    %129 = vmatpush2.bf16.msra.mxu0 0
    %130 = vmatprep.subr.bf16.mxu0 0
    %131 = vmatpush2.bf16.msra.mxu0 0
    %132 = vmatprep.subr.bf16.mxu0 0
    %133 = vmatpush2.bf16.msra.mxu0 0
    %134 = vmatprep.subr.bf16.mxu0 0
    %135 = vmatpush2.bf16.msra.mxu0 0
    %136 = vmatprep.mubr.bf16.mxu0 0
    %137 = vmatmul.mubr.bf16.gmra.mxu0 %v102
    %v138 = vpop.f32.mrf.mxu0
    %v139 = vadd.f32 %v81, %v138
    %v140 = vpop.f32.mrf.mxu0
    %v141 = vpop.f32.mrf.mxu0
    %v142 = vadd.f32 %v81, %v141
    %v143 = vpop.f32.mrf.mxu0
    %144 = vdwg.mxu0
    %v145 = vmax.f32 %v139, 0.0
    %v146 = vmax.f32 %v142, 0.0
    %v147 = vpack.c.bf16 %v146, %v145
    %v148 = vld [vmem:[#allocation7] sm:$0xf]
    %v149 = vld [vmem:[#allocation7 + $0x4] sm:$0xf]
    %v150 = vld [vmem:[#allocation7 + $0x8] sm:$0xf]
    %v151 = vld [vmem:[#allocation7 + $0xc] sm:$0xf]
    %v152 = vld [vmem:[#allocation7 + $0x10] sm:$0xf]
    %v153 = vld [vmem:[#allocation7 + $0x14] sm:$0xf]
    %v154 = vld [vmem:[#allocation7 + $0x18] sm:$0xf]
    %v155 = vld [vmem:[#allocation7 + $0x1c] sm:$0xf]
    %v156 = vld [vmem:[#allocation7 + $0x20] sm:$0xf]
    %v157 = vld [vmem:[#allocation7 + $0x24] sm:$0xf]
    %v158 = vld [vmem:[#allocation7 + $0x28] sm:$0xf]
    %v159 = vld [vmem:[#allocation7 + $0x2c] sm:$0xf]
    %v160 = vld [vmem:[#allocation7 + $0x30] sm:$0xf]
    %v161 = vld [vmem:[#allocation7 + $0x34] sm:$0xf]
    %v162 = vld [vmem:[#allocation7 + $0x38] sm:$0xf]
    %v163 = vld [vmem:[#allocation7 + $0x3c] sm:$0xf]
    %v164 = vld [vmem:[%s4] sm:$0x1]
    %v166 = vlaneseq
    %v167 = vshrl.u32 %v166, 7
    %v168 = vsub.s32 0, %v167
    %v169 = vrot.slane %v164, %v168
    %v187 = vunpack.c.l.b16 %v148
    %v188 = vunpack.c.l.b16 %v149
    %v189 = vunpack.c.l.b16 %v150
    %v190 = vunpack.c.l.b16 %v151
    %v191 = vunpack.c.l.b16 %v152
    %v192 = vunpack.c.l.b16 %v153
    %v193 = vunpack.c.l.b16 %v154
    %v194 = vunpack.c.l.b16 %v155
    %v195 = vunpack.c.l.b16 %v156
    %v196 = vunpack.c.l.b16 %v157
    %v197 = vunpack.c.l.b16 %v158
    %v198 = vunpack.c.l.b16 %v159
    %v199 = vunpack.c.l.b16 %v160
    %v200 = vunpack.c.l.b16 %v161
    %v201 = vunpack.c.l.b16 %v162
    %v202 = vunpack.c.l.b16 %v163
    %v203 = vpack.c.b16 %v188, %v187
    %v204 = vpack.c.b16 %v190, %v189
    %v205 = vpack.c.b16 %v192, %v191
    %v206 = vpack.c.b16 %v194, %v193
    %v207 = vpack.c.b16 %v196, %v195
    %v208 = vpack.c.b16 %v198, %v197
    %v209 = vpack.c.b16 %v200, %v199
    %v210 = vpack.c.b16 %v202, %v201
    %219 = vmatprep.subr.bf16.mxu0 0
    %220 = vmatpush1.bf16.msra.mxu0 %v210
    %221 = vmatprep.subr.bf16.mxu0 0
    %222 = vmatpush1.bf16.msra.mxu0 %v209
    %223 = vmatprep.subr.bf16.mxu0 0
    %224 = vmatpush1.bf16.msra.mxu0 %v208
    %225 = vmatprep.subr.bf16.mxu0 0
    %226 = vmatpush1.bf16.msra.mxu0 %v207
    %227 = vmatprep.subr.bf16.mxu0 0
    %228 = vmatpush1.bf16.msra.mxu0 %v206
    %229 = vmatprep.subr.bf16.mxu0 0
    %230 = vmatpush1.bf16.msra.mxu0 %v205
    %231 = vmatprep.subr.bf16.mxu0 0
    %232 = vmatpush1.bf16.msra.mxu0 %v204
    %233 = vmatprep.subr.bf16.mxu0 0
    %234 = vmatpush1.bf16.msra.mxu0 %v203
    %235 = vmatprep.subr.bf16.mxu0 0
    %236 = vmatpush2.bf16.msra.mxu0 0
    %237 = vmatprep.subr.bf16.mxu0 0
    %238 = vmatpush2.bf16.msra.mxu0 0
    %239 = vmatprep.subr.bf16.mxu0 0
    %240 = vmatpush2.bf16.msra.mxu0 0
    %241 = vmatprep.subr.bf16.mxu0 0
    %242 = vmatpush2.bf16.msra.mxu0 0
    %243 = vmatprep.subr.bf16.mxu0 0
    %244 = vmatpush2.bf16.msra.mxu0 0
    %245 = vmatprep.subr.bf16.mxu0 0
    %246 = vmatpush2.bf16.msra.mxu0 0
    %247 = vmatprep.subr.bf16.mxu0 0
    %248 = vmatpush2.bf16.msra.mxu0 0
    %249 = vmatprep.subr.bf16.mxu0 0
    %250 = vmatpush2.bf16.msra.mxu0 0
    %251 = vmatprep.mubr.bf16.mxu0 0
    %252 = vmatmul.mubr.bf16.gmra.mxu0 %v147
    %v253 = vpop.f32.mrf.mxu0
    %v254 = vadd.f32 %v169, %v253
    %v255 = vpop.f32.mrf.mxu0
    %v256 = vpop.f32.mrf.mxu0
    %v257 = vadd.f32 %v169, %v256
    %v258 = vpop.f32.mrf.mxu0
    %259 = vdwg.mxu0
    %v260 = vmax.f32 %v254, 0.0
    %v261 = vmax.f32 %v257, 0.0
    %v262 = vld [vmem:[%s5] sm:$0x1]
    %v264 = vlaneseq
    %v265 = vshrl.u32 %v264, 7
    %v266 = vsub.s32 0, %v265
    %v267 = vrot.slane %v262, %v266
    %v269 = vmul.f32 %v260, %v267
    %v270 = vmul.f32 %v261, %v267
    %271 = vadd.xlane.f32.xlu0 %v269
    %v272 = vpop.xlane.xlu0 %271
    %273 = vadd.xlane.f32.xlu0 %v270
    %v274 = vpop.xlane.xlu0 %273
    %v275 = vld [vmem:[#allocation2] sm:$0x1]
    %v277 = vlaneseq
    %v278 = vshrl.u32 %v277, 7
    %v279 = vsub.s32 0, %v278
    %v280 = vrot.slane %v275, %v279
    %v282 = vadd.f32 %v272, %v280
    %v283 = vadd.f32 %v274, %v280
    %vm284 = vcmask 7168
    %285 = vst.msk [vmem:[%s7] sm:$0xff] %vm284, %v282
    %286 = vst.msk [vmem:[%s7 + $0x8] sm:$0xff] %vm284, %v283
    // Predicated region
    $region42: #{tpu_custom_call.1} parent=1 // pred_check
      _
    $region43: #{tpu_custom_call.1} parent=1 // pred_check_branch
      %288 = sbr.rel (0) target = $region45
    $region44: #{tpu_custom_call.1} parent=1 // pred_region
      _
    $region45: #{tpu_custom_call.1} parent=1 // pred_fallthru
      _
    // Predicated region
    $region46: #{tpu_custom_call.1} parent=1 // pred_check
      _
    $region47: #{tpu_custom_call.1} parent=1 // pred_check_branch
      %290 = sbr.rel (0) target = $region49
    $region48: #{tpu_custom_call.1} parent=1 // pred_region
      _
    $region49: #{tpu_custom_call.1} parent=1 // pred_fallthru
      _
    %291 = vsyncpa [#allocation4], 1
    %292 = vsyncpa [#allocation6], 1

</llo_original>
